<compile_context>
chip_gen: v7x
topology: tpu7x:2x2x1
jax: 0.10.0
libtpu: 0.0.40
codegen_flags: <defaults>
</compile_context>

<pallas_src>
import jax
import jax.numpy as jnp
from jax.experimental import pallas as pl
from jax.experimental.pallas import tpu as pltpu


def _round_up(x, m):
    return ((x + m - 1) // m) * m


def _pick_hidden_tile(h, th):
    """Largest multiple of 128 dividing h and <= th; falls back to full h."""
    if h % th == 0:
        return th
    best = None
    for t in range(128, th + 1, 128):
        if h % t == 0:
            best = t
    return best if best is not None else h


def _ffn_kernel(x_ref, w1_ref, b1_ref, w2_ref, b2_ref, w3_ref, b3_ref,
                o_ref, acc_ref):
    k = pl.program_id(1)

    @pl.when(k == 0)
    def _init():
        acc_ref[...] = jnp.zeros_like(acc_ref)

    x = x_ref[...]                                              # (tm, E) bf16
    # SiLU branch: swish(x @ W1 + b1)
    h1 = jnp.dot(x, w1_ref[...], preferred_element_type=jnp.float32) + b1_ref[...]
    # gate branch: x @ W2 + b2
    h2 = jnp.dot(x, w2_ref[...], preferred_element_type=jnp.float32) + b2_ref[...]
    # gated intermediate, cast to bf16 for the second MXU pass
    g = (h1 * jax.nn.sigmoid(h1) * h2).astype(w3_ref.dtype)     # (tm, th)
    # accumulate the W3 projection over hidden tiles in f32
    acc_ref[...] += jnp.dot(g, w3_ref[...], preferred_element_type=jnp.float32)

    @pl.when(k == pl.num_programs(1) - 1)
    def _finalize():
        # b3 added exactly once, output stored in the (lane-dense) input dtype
        o_ref[...] = (acc_ref[...] + b3_ref[...]).astype(o_ref.dtype)
        # TODO(synk): dropout is identity (eval-mode semantics); training-mode
        # dropout would use pltpu.prng_seed / pltpu.prng_random_bits for a mask.


def feed_forward(x, params, *, tm=256, th=512):
    """x: [..., E]. params: w1/w2/w3 pre-transposed [in, out] (bf16), biases [1, out] f32."""
    orig_shape = x.shape
    e = orig_shape[-1]
    x2d = x.reshape(-1, e)
    n = x2d.shape[0]
    h = params["w1"].shape[1]
    out_dtype = x.dtype

    # Effective row tile: big by default, never larger than the (8-rounded) row count;
    # pad rows so the grid divides evenly.
    tm_eff = min(tm, max(8, _round_up(n, 8)))
    n_pad = _round_up(n, tm_eff)
    if n_pad != n:
        x2d = jnp.pad(x2d, ((0, n_pad - n), (0, 0)))

    # Effective hidden tile: divides H exactly, multiple of 128 when possible.
    th_eff = _pick_hidden_tile(h, th)

    x2d = x2d.astype(params["w1"].dtype)

    grid = (n_pad // tm_eff, h // th_eff)

    # Advisory cost estimate (helps XLA schedule neighbors around the kernel).
    wbytes = jnp.dtype(params["w1"].dtype).itemsize
    obytes = jnp.dtype(out_dtype).itemsize
    flops = 6 * n_pad * e * h                       # three matmuls, 2*N*E*H each
    bytes_accessed = (
        n_pad * e * wbytes                          # x
        + 3 * e * h * wbytes                        # W1, W2, W3
        + (2 * h + e) * 4                           # biases
        + n_pad * e * obytes)                       # output
    cost = pl.CostEstimate(flops=flops, transcendentals=n_pad * h,
                           bytes_accessed=bytes_accessed)

    # Rough VMEM budget: double-buffered streams + f32 accumulator, with headroom.
    vmem_needed = (
        2 * tm_eff * e * wbytes                     # x tiles
        + 2 * 3 * e * th_eff * wbytes               # W1/W2/W3 tiles
        + 2 * (2 * th_eff + e) * 4                  # bias tiles
        + 2 * tm_eff * e * obytes                   # out tiles
        + tm_eff * e * 4)                           # accumulator
    vmem_limit = int(min(max(2 * vmem_needed, 32 * 1024 * 1024),
                         100 * 1024 * 1024))

    out = pl.pallas_call(
        _ffn_kernel,
        out_shape=jax.ShapeDtypeStruct((n_pad, e), out_dtype),
        grid_spec=pltpu.PrefetchScalarGridSpec(
            num_scalar_prefetch=0,
            grid=grid,
            in_specs=[
                pl.BlockSpec((tm_eff, e), lambda i, k: (i, 0)),    # x row tile
                pl.BlockSpec((e, th_eff), lambda i, k: (0, k)),    # W1 tile
                pl.BlockSpec((1, th_eff), lambda i, k: (0, k)),    # b1 tile
                pl.BlockSpec((e, th_eff), lambda i, k: (0, k)),    # W2 tile
                pl.BlockSpec((1, th_eff), lambda i, k: (0, k)),    # b2 tile
                pl.BlockSpec((th_eff, e), lambda i, k: (k, 0)),    # W3 tile
                pl.BlockSpec((1, e), lambda i, k: (0, 0)),         # b3
            ],
            out_specs=pl.BlockSpec((tm_eff, e), lambda i, k: (i, 0)),
            scratch_shapes=[pltpu.VMEM((tm_eff, e), jnp.float32)],
        ),
        compiler_params=pltpu.CompilerParams(
            dimension_semantics=("parallel", "arbitrary"),
            vmem_limit_bytes=vmem_limit,
        ),
        cost_estimate=cost,
    )(x2d, params["w1"], params["b1"], params["w2"], params["b2"],
      params["w3"], params["b3"])
    return out[:n].reshape(orig_shape)


def init_params(key, embed_dim, wdtype=jnp.bfloat16):
    """Deterministic nn.Linear-style init (uniform +-1/sqrt(fan_in)), bf16 weights."""
    hidden = 4 * embed_dim
    ks = jax.random.split(key, 6)

    def lin(kw, kb, fan_in, fan_out):
        bound = 1.0 / jnp.sqrt(fan_in)
        w = jax.random.uniform(kw, (fan_in, fan_out), jnp.float32, -bound, bound)
        b = jax.random.uniform(kb, (1, fan_out), jnp.float32, -bound, bound)
        return w.astype(wdtype), b

    w1, b1 = lin(ks[0], ks[1], embed_dim, hidden)
    w2, b2 = lin(ks[2], ks[3], embed_dim, hidden)
    w3, b3 = lin(ks[4], ks[5], hidden, embed_dim)
    return {"w1": w1, "b1": b1, "w2": w2, "b2": b2, "w3": w3, "b3": b3}


def reference(x, p):
    """f32 reference on the same (bf16-quantized) inputs."""
    xf = x.astype(jnp.float32)
    w1 = p["w1"].astype(jnp.float32)
    w2 = p["w2"].astype(jnp.float32)
    w3 = p["w3"].astype(jnp.float32)
    h1 = xf @ w1 + p["b1"]
    swish = h1 * jax.nn.sigmoid(h1)
    h2 = xf @ w2 + p["b2"]
    return (swish * h2) @ w3 + p["b3"]


if __name__ == "__main__":
    key = jax.random.PRNGKey(0)
    batch, seq, embed_dim = 2, 8, 128      # E multiple of 128 -> lane-dense output
    k_x, k_p = jax.random.split(key)

    x = jax.random.normal(k_x, (batch, seq, embed_dim), jnp.float32)
    params = init_params(k_p, embed_dim)

    x_bf16 = x.astype(jnp.bfloat16)
    out = feed_forward(x_bf16, params)
    jax.block_until_ready(out)

    ref = reference(x_bf16.reshape(batch * seq, embed_dim), params)
    ref = ref.reshape(batch, seq, embed_dim)
    assert jnp.allclose(out.astype(jnp.float32), ref, atol=2e-2, rtol=2e-2), \
        "mismatch vs reference"
    print("KERNEL_OK")
</pallas_src>

<mosaic_0001>
module attributes {stable_mosaic.version = 11 : i64} {
  func.func @_ffn_kernel(%arg0: i32, %arg1: i32, %arg2: memref<16x128xbf16, #tpu.memory_space<vmem>>, %arg3: memref<128x512xbf16, #tpu.memory_space<vmem>>, %arg4: memref<1x512xf32, #tpu.memory_space<vmem>>, %arg5: memref<128x512xbf16, #tpu.memory_space<vmem>>, %arg6: memref<1x512xf32, #tpu.memory_space<vmem>>, %arg7: memref<512x128xbf16, #tpu.memory_space<vmem>>, %arg8: memref<1x128xf32, #tpu.memory_space<vmem>>, %arg9: memref<16x128xbf16, #tpu.memory_space<vmem>>, %arg10: memref<16x128xf32, #tpu.memory_space<vmem>>) attributes {dimension_semantics = [#tpu.dimension_semantics<parallel>, #tpu.dimension_semantics<arbitrary>], iteration_bounds = array<i64: 1, 1>, scalar_prefetch = 0 : i64, scratch_operands = 1 : i64, tpu.core_type = #tpu.core_type<tc>, window_params = [{transform_indices = @transform_0, window_bounds = array<i64: 16, 128>}, {transform_indices = @transform_1, window_bounds = array<i64: 128, 512>}, {transform_indices = @transform_2, window_bounds = array<i64: 1, 512>}, {transform_indices = @transform_3, window_bounds = array<i64: 128, 512>}, {transform_indices = @transform_4, window_bounds = array<i64: 1, 512>}, {transform_indices = @transform_5, window_bounds = array<i64: 512, 128>}, {pipeline_mode = #tpu.pipeline_mode<synchronous>, transform_indices = @transform_6, window_bounds = array<i64: 1, 128>}, {transform_indices = @transform_7, window_bounds = array<i64: 16, 128>}]} {
    %c0_i32 = arith.constant 0 : i32
    %0 = arith.cmpi eq, %arg1, %c0_i32 : i32
    %1 = arith.extui %0 : i1 to i32
    %c0_i32_0 = arith.constant 0 : i32
    %2 = arith.cmpi ne, %1, %c0_i32_0 : i32
    scf.if %2 {
      %cst_21 = arith.constant 0.000000e+00 : f32
      %30 = vector.broadcast %cst_21 : f32 to vector<16x128xf32>
      %c0_22 = arith.constant 0 : index
      %c0_23 = arith.constant 0 : index
      %31 = vector.load %arg10[%c0_22, %c0_23] : memref<16x128xf32, #tpu.memory_space<vmem>>, vector<16x128xf32>
      tpu.vector_store %arg10[%c0_22, %c0_23], %30 {strides = array<i32>} : memref<16x128xf32, #tpu.memory_space<vmem>>, vector<16x128xf32>,
    } else {
    }
    %c0 = arith.constant 0 : index
    %c0_1 = arith.constant 0 : index
    %3 = vector.load %arg2[%c0, %c0_1] : memref<16x128xbf16, #tpu.memory_space<vmem>>, vector<16x128xbf16>
    %c0_2 = arith.constant 0 : index
    %c0_3 = arith.constant 0 : index
    %4 = vector.load %arg3[%c0_2, %c0_3] : memref<128x512xbf16, #tpu.memory_space<vmem>>, vector<128x512xbf16>
    %cst = arith.constant dense<0.000000e+00> : vector<16x512xf32>
    %5 = tpu.matmul %3, %4, %cst {dimension_numbers = #tpu.dot_dimension_numbers<[1], [0], [0], [1], [0, 0, 1, 1], [], []>} : vector<16x128xbf16>, vector<128x512xbf16>, vector<16x512xf32> -> vector<16x512xf32>
    %c0_4 = arith.constant 0 : index
    %c0_5 = arith.constant 0 : index
    %6 = vector.load %arg4[%c0_4, %c0_5] : memref<1x512xf32, #tpu.memory_space<vmem>>, vector<1x512xf32>
    %7 = vector.broadcast %6 : vector<1x512xf32> to vector<16x512xf32>
    %8 = arith.addf %5, %7 : vector<16x512xf32>
    %c0_6 = arith.constant 0 : index
    %c0_7 = arith.constant 0 : index
    %9 = vector.load %arg5[%c0_6, %c0_7] : memref<128x512xbf16, #tpu.memory_space<vmem>>, vector<128x512xbf16>
    %cst_8 = arith.constant dense<0.000000e+00> : vector<16x512xf32>
    %10 = tpu.matmul %3, %9, %cst_8 {dimension_numbers = #tpu.dot_dimension_numbers<[1], [0], [0], [1], [0, 0, 1, 1], [], []>} : vector<16x128xbf16>, vector<128x512xbf16>, vector<16x512xf32> -> vector<16x512xf32>
    %c0_9 = arith.constant 0 : index
    %c0_10 = arith.constant 0 : index
    %11 = vector.load %arg6[%c0_9, %c0_10] : memref<1x512xf32, #tpu.memory_space<vmem>>, vector<1x512xf32>
    %12 = vector.broadcast %11 : vector<1x512xf32> to vector<16x512xf32>
    %13 = arith.addf %10, %12 : vector<16x512xf32>
    %14 = arith.negf %8 : vector<16x512xf32>
    %15 = math.exp %14 : vector<16x512xf32>
    %cst_11 = arith.constant 1.000000e+00 : f32
    %16 = vector.broadcast %cst_11 : f32 to vector<16x512xf32>
    %17 = arith.addf %16, %15 : vector<16x512xf32>
    %18 = arith.divf %16, %17 : vector<16x512xf32>
    %19 = arith.mulf %8, %18 : vector<16x512xf32>
    %20 = arith.mulf %19, %13 : vector<16x512xf32>
    %21 = arith.truncf %20 : vector<16x512xf32> to vector<16x512xbf16>
    %c0_12 = arith.constant 0 : index
    %c0_13 = arith.constant 0 : index
    %22 = vector.load %arg10[%c0_12, %c0_13] : memref<16x128xf32, #tpu.memory_space<vmem>>, vector<16x128xf32>
    %c0_14 = arith.constant 0 : index
    %c0_15 = arith.constant 0 : index
    %23 = vector.load %arg7[%c0_14, %c0_15] : memref<512x128xbf16, #tpu.memory_space<vmem>>, vector<512x128xbf16>
    %cst_16 = arith.constant dense<0.000000e+00> : vector<16x128xf32>
    %24 = tpu.matmul %21, %23, %cst_16 {dimension_numbers = #tpu.dot_dimension_numbers<[1], [0], [0], [1], [0, 0, 1, 1], [], []>} : vector<16x512xbf16>, vector<512x128xbf16>, vector<16x128xf32> -> vector<16x128xf32>
    %25 = arith.addf %22, %24 : vector<16x128xf32>
    %c0_17 = arith.constant 0 : index
    %c0_18 = arith.constant 0 : index
    %26 = vector.load %arg10[%c0_17, %c0_18] : memref<16x128xf32, #tpu.memory_space<vmem>>, vector<16x128xf32>
    tpu.vector_store %arg10[%c0_17, %c0_18], %25 {strides = array<i32>} : memref<16x128xf32, #tpu.memory_space<vmem>>, vector<16x128xf32>,
    %c0_i32_19 = arith.constant 0 : i32
    %27 = arith.cmpi eq, %arg1, %c0_i32_19 : i32
    %28 = arith.extui %27 : i1 to i32
    %c0_i32_20 = arith.constant 0 : i32
    %29 = arith.cmpi ne, %28, %c0_i32_20 : i32
    scf.if %29 {
      %c0_21 = arith.constant 0 : index
      %c0_22 = arith.constant 0 : index
      %30 = vector.load %arg10[%c0_21, %c0_22] : memref<16x128xf32, #tpu.memory_space<vmem>>, vector<16x128xf32>
      %c0_23 = arith.constant 0 : index
      %c0_24 = arith.constant 0 : index
      %31 = vector.load %arg8[%c0_23, %c0_24] : memref<1x128xf32, #tpu.memory_space<vmem>>, vector<1x128xf32>
      %32 = vector.broadcast %31 : vector<1x128xf32> to vector<16x128xf32>
      %33 = arith.addf %30, %32 : vector<16x128xf32>
      %34 = arith.truncf %33 : vector<16x128xf32> to vector<16x128xbf16>
      %c0_25 = arith.constant 0 : index
      %c0_26 = arith.constant 0 : index
      %35 = vector.load %arg9[%c0_25, %c0_26] : memref<16x128xbf16, #tpu.memory_space<vmem>>, vector<16x128xbf16>
      tpu.vector_store %arg9[%c0_25, %c0_26], %34 {strides = array<i32>} : memref<16x128xbf16, #tpu.memory_space<vmem>>, vector<16x128xbf16>,
    } else {
    }
    return
  }
  func.func @transform_0(%arg0: i32, %arg1: i32) -> (i32, i32) {
    %c0_i32 = arith.constant 0 : i32
    %c0_i32_0 = arith.constant 0 : i32
    return %arg0, %c0_i32 : i32, i32
  }
  func.func @transform_1(%arg0: i32, %arg1: i32) -> (i32, i32) {
    %c0_i32 = arith.constant 0 : i32
    %c0_i32_0 = arith.constant 0 : i32
    return %c0_i32, %arg1 : i32, i32
  }
  func.func @transform_2(%arg0: i32, %arg1: i32) -> (i32, i32) {
    %c0_i32 = arith.constant 0 : i32
    %c0_i32_0 = arith.constant 0 : i32
    return %c0_i32, %arg1 : i32, i32
  }
  func.func @transform_3(%arg0: i32, %arg1: i32) -> (i32, i32) {
    %c0_i32 = arith.constant 0 : i32
    %c0_i32_0 = arith.constant 0 : i32
    return %c0_i32, %arg1 : i32, i32
  }
  func.func @transform_4(%arg0: i32, %arg1: i32) -> (i32, i32) {
    %c0_i32 = arith.constant 0 : i32
    %c0_i32_0 = arith.constant 0 : i32
    return %c0_i32, %arg1 : i32, i32
  }
  func.func @transform_5(%arg0: i32, %arg1: i32) -> (i32, i32) {
    %c0_i32 = arith.constant 0 : i32
    %c0_i32_0 = arith.constant 0 : i32
    return %arg1, %c0_i32 : i32, i32
  }
  func.func @transform_6(%arg0: i32, %arg1: i32) -> (i32, i32) {
    %c0_i32 = arith.constant 0 : i32
    %c0_i32_0 = arith.constant 0 : i32
    %c0_i32_1 = arith.constant 0 : i32
    return %c0_i32, %c0_i32_0 : i32, i32
  }
  func.func @transform_7(%arg0: i32, %arg1: i32) -> (i32, i32) {
    %c0_i32 = arith.constant 0 : i32
    %c0_i32_0 = arith.constant 0 : i32
    return %arg0, %c0_i32 : i32, i32
  }
}

</mosaic_0001>

<llo_original>
// kernel: tpu_custom_call.1
$region0: #{tpu_custom_call.1}
  #allocation0 [shape = 'u32[]', space=smem, size = 0x4, offset = 0x4, fixed_abs, tag = 'smem constant byte address 0x4 - core index']
  #allocation1 [shape = 'u32[144,128]{1,0:T(1,128)}', space=vmem, size = 0x12000, scoped, tag = 'internal scratch']
  #allocation2 [shape = 'f32[16,128]{1,0:T(8,128)}', space=vmem, size = 0x2000, scoped, tag = 'scratch operand']
  %s0 = inlined_call_operand.hbm [shape: bf16[16,128], index: 0, kind: input, shape index: {}]
  %s1 = inlined_call_operand.hbm [shape: bf16[128,512], index: 1, kind: input, shape index: {}]
  %s2 = inlined_call_operand.vmem [shape: f32[1,512], index: 2, kind: input, shape index: {}]
  %s3 = inlined_call_operand.hbm [shape: bf16[128,512], index: 3, kind: input, shape index: {}]
  %s4 = inlined_call_operand.vmem [shape: f32[1,512], index: 4, kind: input, shape index: {}]
  %s5 = inlined_call_operand.hbm [shape: bf16[512,128], index: 5, kind: input, shape index: {}]
  %s6 = inlined_call_operand.vmem [shape: f32[1,128], index: 6, kind: input, shape index: {}]
  %s7 = inlined_call_operand.hbm [shape: bf16[16,128], index: 7, kind: output, shape index: {}]
  %s8 = sld [smem:[#allocation0]]
  $region62: #{tpu_custom_call.1} parent=0
    _
  %s10 = ssub.s32 1, %s8
  %s11 = scalar_select 0, %s10, %s8
  $region1: #{tpu_custom_call.1} parent=0
    #allocation3 [shape = 'u8[4096]{0}', space=vmem, size = 0x1000, scoped, tag = 'input window, operand 0, single buffered']
    #allocation4 [shape = 's32[1]{0}', space=sflag, size = 0x4, scoped, tag = 'scoped memory for tpu_custom_call.1']
    #allocation5 [shape = 's32[1]{0}', space=sflag, size = 0x4, scoped, tag = 'scoped memory for tpu_custom_call.1']
    #allocation6 [shape = 'u8[131072]{0}', space=vmem, size = 0x20000, scoped, tag = 'input window, operand 1, single buffered']
    #allocation7 [shape = 's32[1]{0}', space=sflag, size = 0x4, scoped, tag = 'scoped memory for tpu_custom_call.1']
    #allocation8 [shape = 'u8[131072]{0}', space=vmem, size = 0x20000, scoped, tag = 'input window, operand 3, single buffered']
    #allocation9 [shape = 'u8[131072]{0}', space=vmem, size = 0x20000, scoped, tag = 'input window, operand 5, single buffered']
    #allocation10 [shape = 's32[1]{0}', space=sflag, size = 0x4, scoped, tag = 'scoped memory for tpu_custom_call.1']
    #allocation11 [shape = 'u8[4096]{0}', space=vmem, size = 0x1000, scoped, tag = 'output window, operand 0, single buffered']
    %12 = vsyncpa [#allocation4], 0
    %13 = vsyncpa [#allocation7], 0
    %14 = vsyncpa [#allocation10], 0
    %15 = vsyncpa [#allocation5], 0
    // Predicated region
    $region2: #{tpu_custom_call.1} parent=1 // pred_check
      _
    $region3: #{tpu_custom_call.1} parent=1 // pred_check_branch
      %17 = sbr.rel (0) target = $region5
    $region4: #{tpu_custom_call.1} parent=1 // pred_region
      %s19 = ssub.s32 128, 128
      %20 = vsyncadd [#allocation4], %s19
      %s21 = sshll.u32 [#allocation3], 4
      %s22 = int_to_ptr.vmem [resolvable:$true] %s21
      %27 = dma.hbm_to_vmem [thread:$0]  %s0, 128, %s22, [#allocation4], 64, 64, 4
    $region5: #{tpu_custom_call.1} parent=1 // pred_fallthru
      _
    // Predicated region
    $region6: #{tpu_custom_call.1} parent=1 // pred_check
      _
    $region7: #{tpu_custom_call.1} parent=1 // pred_check_branch
      %29 = sbr.rel (0) target = $region9
    $region8: #{tpu_custom_call.1} parent=1 // pred_region
      %s31 = ssub.s32 4096, 4096
      %32 = vsyncadd [#allocation7], %s31
      %s33 = sshll.u32 [#allocation6], 4
      %s34 = int_to_ptr.vmem [resolvable:$true] %s33
      %39 = dma.hbm_to_vmem [thread:$0]  %s1, 4096, %s34, [#allocation7], 256, 256, 16
    $region9: #{tpu_custom_call.1} parent=1 // pred_fallthru
      _
    // Predicated region
    $region10: #{tpu_custom_call.1} parent=1 // pred_check
      _
    $region11: #{tpu_custom_call.1} parent=1 // pred_check_branch
      %41 = sbr.rel (0) target = $region13
    $region12: #{tpu_custom_call.1} parent=1 // pred_region
      _
    $region13: #{tpu_custom_call.1} parent=1 // pred_fallthru
      _
    // Predicated region
    $region14: #{tpu_custom_call.1} parent=1 // pred_check
      _
    $region15: #{tpu_custom_call.1} parent=1 // pred_check_branch
      %43 = sbr.rel (0) target = $region17
    $region16: #{tpu_custom_call.1} parent=1 // pred_region
      %s45 = ssub.s32 4096, 4096
      %46 = vsyncadd [#allocation7], %s45
      %s47 = sshll.u32 [#allocation8], 4
      %s48 = int_to_ptr.vmem [resolvable:$true] %s47
      %53 = dma.hbm_to_vmem [thread:$0]  %s3, 4096, %s48, [#allocation7], 256, 256, 16
    $region17: #{tpu_custom_call.1} parent=1 // pred_fallthru
      _
    // Predicated region
    $region18: #{tpu_custom_call.1} parent=1 // pred_check
      _
    $region19: #{tpu_custom_call.1} parent=1 // pred_check_branch
      %55 = sbr.rel (0) target = $region21
    $region20: #{tpu_custom_call.1} parent=1 // pred_region
      _
    $region21: #{tpu_custom_call.1} parent=1 // pred_fallthru
      _
    // Predicated region
    $region22: #{tpu_custom_call.1} parent=1 // pred_check
      _
    $region23: #{tpu_custom_call.1} parent=1 // pred_check_branch
      %57 = sbr.rel (0) target = $region25
    $region24: #{tpu_custom_call.1} parent=1 // pred_region
      %s59 = ssub.s32 4096, 4096
      %60 = vsyncadd [#allocation10], %s59
      %s61 = sshll.u32 [#allocation9], 4
      %s62 = int_to_ptr.vmem [resolvable:$true] %s61
      %67 = dma.hbm_to_vmem [thread:$0]  %s5, 4096, %s62, [#allocation10], 64, 64, 4
    $region25: #{tpu_custom_call.1} parent=1 // pred_fallthru
      _
    // Predicated region
    $region26: #{tpu_custom_call.1} parent=1 // pred_check
      _
    $region27: #{tpu_custom_call.1} parent=1 // pred_check_branch
      %69 = sbr.rel (0) target = $region29
    $region28: #{tpu_custom_call.1} parent=1 // pred_region
      _
    $region29: #{tpu_custom_call.1} parent=1 // pred_fallthru
      _
    // Predicated region
    $region30: #{tpu_custom_call.1} parent=1 // pred_check
      _
    $region31: #{tpu_custom_call.1} parent=1 // pred_check_branch
      %71 = sbr.rel (0) target = $region33
    $region32: #{tpu_custom_call.1} parent=1 // pred_region
      %72 = dma.done [#allocation4], 128
    $region33: #{tpu_custom_call.1} parent=1 // pred_fallthru
      _
    // Predicated region
    $region34: #{tpu_custom_call.1} parent=1 // pred_check
      _
    $region35: #{tpu_custom_call.1} parent=1 // pred_check_branch
      %74 = sbr.rel (0) target = $region37
    $region36: #{tpu_custom_call.1} parent=1 // pred_region
      %75 = dma.done [#allocation7], 4096
    $region37: #{tpu_custom_call.1} parent=1 // pred_fallthru
      _
    // Predicated region
    $region38: #{tpu_custom_call.1} parent=1 // pred_check
      _
    $region39: #{tpu_custom_call.1} parent=1 // pred_check_branch
      %77 = sbr.rel (0) target = $region41
    $region40: #{tpu_custom_call.1} parent=1 // pred_region
      %78 = dma.done [#allocation7], 4096
    $region41: #{tpu_custom_call.1} parent=1 // pred_fallthru
      _
    // Predicated region
    $region42: #{tpu_custom_call.1} parent=1 // pred_check
      _
    $region43: #{tpu_custom_call.1} parent=1 // pred_check_branch
      %80 = sbr.rel (0) target = $region45
    $region44: #{tpu_custom_call.1} parent=1 // pred_region
      %81 = dma.done [#allocation10], 4096
    $region45: #{tpu_custom_call.1} parent=1 // pred_fallthru
      _
    %p83 = scmp.eq.s32.totalorder 0, 0
    // Predicated region
    $region46: #{tpu_custom_call.1} parent=1 // pred_check
      %p84 = pneg %p83
    $region47: #{tpu_custom_call.1} parent=1 // pred_check_branch
      %86 = sbr.rel (%p84) target = $region49
    $region48: #{tpu_custom_call.1} parent=1 // pred_region
      %87 = vst [vmem:[#allocation2] sm:$0xff] 0.0
      %88 = vst [vmem:[#allocation2 + $0x8] sm:$0xff] 0.0
    $region49: #{tpu_custom_call.1} parent=1 // pred_fallthru
      _
    %v89 = vld [vmem:[#allocation3] sm:$0xf]
    %v90 = vld [vmem:[#allocation3 + $0x4] sm:$0xf]
    %v91 = vld [vmem:[#allocation6] sm:$0xff]
    %v92 = vld [vmem:[#allocation6 + $0x8] sm:$0xff]
    %v93 = vld [vmem:[#allocation6 + $0x10] sm:$0xff]
    %v94 = vld [vmem:[#allocation6 + $0x18] sm:$0xff]
    %v95 = vld [vmem:[#allocation6 + $0x20] sm:$0xff]
    %v96 = vld [vmem:[#allocation6 + $0x28] sm:$0xff]
    %v97 = vld [vmem:[#allocation6 + $0x30] sm:$0xff]
    %v98 = vld [vmem:[#allocation6 + $0x38] sm:$0xff]
    %v99 = vld [vmem:[#allocation6 + $0x40] sm:$0xff]
    %v100 = vld [vmem:[#allocation6 + $0x48] sm:$0xff]
    %v101 = vld [vmem:[#allocation6 + $0x50] sm:$0xff]
    %v102 = vld [vmem:[#allocation6 + $0x58] sm:$0xff]
    %v103 = vld [vmem:[#allocation6 + $0x60] sm:$0xff]
    %v104 = vld [vmem:[#allocation6 + $0x68] sm:$0xff]
    %v105 = vld [vmem:[#allocation6 + $0x70] sm:$0xff]
    %v106 = vld [vmem:[#allocation6 + $0x78] sm:$0xff]
    %v107 = vld [vmem:[#allocation6 + $0x80] sm:$0xff]
    %v108 = vld [vmem:[#allocation6 + $0x88] sm:$0xff]
    %v109 = vld [vmem:[#allocation6 + $0x90] sm:$0xff]
    %v110 = vld [vmem:[#allocation6 + $0x98] sm:$0xff]
    %v111 = vld [vmem:[#allocation6 + $0xa0] sm:$0xff]
    %v112 = vld [vmem:[#allocation6 + $0xa8] sm:$0xff]
    %v113 = vld [vmem:[#allocation6 + $0xb0] sm:$0xff]
    %v114 = vld [vmem:[#allocation6 + $0xb8] sm:$0xff]
    %v115 = vld [vmem:[#allocation6 + $0xc0] sm:$0xff]
    %v116 = vld [vmem:[#allocation6 + $0xc8] sm:$0xff]
    %v117 = vld [vmem:[#allocation6 + $0xd0] sm:$0xff]
    %v118 = vld [vmem:[#allocation6 + $0xd8] sm:$0xff]
    %v119 = vld [vmem:[#allocation6 + $0xe0] sm:$0xff]
    %v120 = vld [vmem:[#allocation6 + $0xe8] sm:$0xff]
    %v121 = vld [vmem:[#allocation6 + $0xf0] sm:$0xff]
    %v122 = vld [vmem:[#allocation6 + $0xf8] sm:$0xff]
    %v123 = vld [vmem:[%s2] sm:$0xf]
    %v125 = vlaneseq
    %v126 = vshrl.u32 %v125, 7
    %v127 = vsub.s32 0, %v126
    %v128 = vrot.slane %v123, %v127
    %v129 = vlaneseq
    %v130 = vshrl.u32 %v129, 7
    %v131 = vsub.s32 1, %v130
    %v132 = vrot.slane %v123, %v131
    %v133 = vlaneseq
    %v134 = vshrl.u32 %v133, 7
    %v135 = vsub.s32 2, %v134
    %v136 = vrot.slane %v123, %v135
    %v137 = vlaneseq
    %v138 = vshrl.u32 %v137, 7
    %v139 = vsub.s32 3, %v138
    %v140 = vrot.slane %v123, %v139
    %v147 = vunpack.c.l.b16 %v89
    %v148 = vunpack.c.l.b16 %v90
    %v149 = vpack.c.b16 %v148, %v147
    %v183 = vunpack.c.l.b16 %v91
    %v184 = vunpack.c.h.b16 %v91
    %v185 = vunpack.c.l.b16 %v92
    %v186 = vunpack.c.h.b16 %v92
    %v187 = vunpack.c.l.b16 %v93
    %v188 = vunpack.c.h.b16 %v93
    %v189 = vunpack.c.l.b16 %v94
    %v190 = vunpack.c.h.b16 %v94
    %v191 = vunpack.c.l.b16 %v95
    %v192 = vunpack.c.h.b16 %v95
    %v193 = vunpack.c.l.b16 %v96
    %v194 = vunpack.c.h.b16 %v96
    %v195 = vunpack.c.l.b16 %v97
    %v196 = vunpack.c.h.b16 %v97
    %v197 = vunpack.c.l.b16 %v98
    %v198 = vunpack.c.h.b16 %v98
    %v199 = vunpack.c.l.b16 %v99
    %v200 = vunpack.c.h.b16 %v99
    %v201 = vunpack.c.l.b16 %v100
    %v202 = vunpack.c.h.b16 %v100
    %v203 = vunpack.c.l.b16 %v101
    %v204 = vunpack.c.h.b16 %v101
    %v205 = vunpack.c.l.b16 %v102
    %v206 = vunpack.c.h.b16 %v102
    %v207 = vunpack.c.l.b16 %v103
    %v208 = vunpack.c.h.b16 %v103
    %v209 = vunpack.c.l.b16 %v104
    %v210 = vunpack.c.h.b16 %v104
    %v211 = vunpack.c.l.b16 %v105
    %v212 = vunpack.c.h.b16 %v105
    %v213 = vunpack.c.l.b16 %v106
    %v214 = vunpack.c.h.b16 %v106
    %v215 = vunpack.c.l.b16 %v107
    %v216 = vunpack.c.h.b16 %v107
    %v217 = vunpack.c.l.b16 %v108
    %v218 = vunpack.c.h.b16 %v108
    %v219 = vunpack.c.l.b16 %v109
    %v220 = vunpack.c.h.b16 %v109
    %v221 = vunpack.c.l.b16 %v110
    %v222 = vunpack.c.h.b16 %v110
    %v223 = vunpack.c.l.b16 %v111
    %v224 = vunpack.c.h.b16 %v111
    %v225 = vunpack.c.l.b16 %v112
    %v226 = vunpack.c.h.b16 %v112
    %v227 = vunpack.c.l.b16 %v113
    %v228 = vunpack.c.h.b16 %v113
    %v229 = vunpack.c.l.b16 %v114
    %v230 = vunpack.c.h.b16 %v114
    %v231 = vunpack.c.l.b16 %v115
    %v232 = vunpack.c.h.b16 %v115
    %v233 = vunpack.c.l.b16 %v116
    %v234 = vunpack.c.h.b16 %v116
    %v235 = vunpack.c.l.b16 %v117
    %v236 = vunpack.c.h.b16 %v117
    %v237 = vunpack.c.l.b16 %v118
    %v238 = vunpack.c.h.b16 %v118
    %v239 = vunpack.c.l.b16 %v119
    %v240 = vunpack.c.h.b16 %v119
    %v241 = vunpack.c.l.b16 %v120
    %v242 = vunpack.c.h.b16 %v120
    %v243 = vunpack.c.l.b16 %v121
    %v244 = vunpack.c.h.b16 %v121
    %v245 = vunpack.c.l.b16 %v122
    %v246 = vunpack.c.h.b16 %v122
    %v247 = vpack.c.b16 %v187, %v183
    %v248 = vpack.c.b16 %v188, %v184
    %v249 = vpack.c.b16 %v189, %v185
    %v250 = vpack.c.b16 %v190, %v186
    %v251 = vpack.c.b16 %v195, %v191
    %v252 = vpack.c.b16 %v196, %v192
    %v253 = vpack.c.b16 %v197, %v193
    %v254 = vpack.c.b16 %v198, %v194
    %v255 = vpack.c.b16 %v203, %v199
    %v256 = vpack.c.b16 %v204, %v200
    %v257 = vpack.c.b16 %v205, %v201
    %v258 = vpack.c.b16 %v206, %v202
    %v259 = vpack.c.b16 %v211, %v207
    %v260 = vpack.c.b16 %v212, %v208
    %v261 = vpack.c.b16 %v213, %v209
    %v262 = vpack.c.b16 %v214, %v210
    %v263 = vpack.c.b16 %v219, %v215
    %v264 = vpack.c.b16 %v220, %v216
    %v265 = vpack.c.b16 %v221, %v217
    %v266 = vpack.c.b16 %v222, %v218
    %v267 = vpack.c.b16 %v227, %v223
    %v268 = vpack.c.b16 %v228, %v224
    %v269 = vpack.c.b16 %v229, %v225
    %v270 = vpack.c.b16 %v230, %v226
    %v271 = vpack.c.b16 %v235, %v231
    %v272 = vpack.c.b16 %v236, %v232
    %v273 = vpack.c.b16 %v237, %v233
    %v274 = vpack.c.b16 %v238, %v234
    %v275 = vpack.c.b16 %v243, %v239
    %v276 = vpack.c.b16 %v244, %v240
    %v277 = vpack.c.b16 %v245, %v241
    %v278 = vpack.c.b16 %v246, %v242
    %311 = vmatprep.subr.bf16.mxu0 %v248
    %312 = vmatpush1.bf16.msra.mxu0 %v247
    %313 = vmatprep.subr.bf16.mxu0 %v252
    %314 = vmatpush1.bf16.msra.mxu0 %v251
    %315 = vmatprep.subr.bf16.mxu0 %v256
    %316 = vmatpush1.bf16.msra.mxu0 %v255
    %317 = vmatprep.subr.bf16.mxu0 %v260
    %318 = vmatpush1.bf16.msra.mxu0 %v259
    %319 = vmatprep.subr.bf16.mxu0 %v264
    %320 = vmatpush1.bf16.msra.mxu0 %v263
    %321 = vmatprep.subr.bf16.mxu0 %v268
    %322 = vmatpush1.bf16.msra.mxu0 %v267
    %323 = vmatprep.subr.bf16.mxu0 %v272
    %324 = vmatpush1.bf16.msra.mxu0 %v271
    %325 = vmatprep.subr.bf16.mxu0 %v276
    %326 = vmatpush1.bf16.msra.mxu0 %v275
    %327 = vmatprep.subr.bf16.mxu0 0
    %328 = vmatpush1.bf16.msra.mxu0 0
    %329 = vmatprep.subr.bf16.mxu0 0
    %330 = vmatpush1.bf16.msra.mxu0 0
    %331 = vmatprep.subr.bf16.mxu0 0
    %332 = vmatpush1.bf16.msra.mxu0 0
    %333 = vmatprep.subr.bf16.mxu0 0
    %334 = vmatpush1.bf16.msra.mxu0 0
    %335 = vmatprep.subr.bf16.mxu0 0
    %336 = vmatpush1.bf16.msra.mxu0 0
    %337 = vmatprep.subr.bf16.mxu0 0
    %338 = vmatpush1.bf16.msra.mxu0 0
    %339 = vmatprep.subr.bf16.mxu0 0
    %340 = vmatpush1.bf16.msra.mxu0 0
    %341 = vmatprep.subr.bf16.mxu0 0
    %342 = vmatpush1.bf16.msra.mxu0 0
    %343 = vmatprep.mubr.bf16.mxu0 0
    %344 = vmatmul.mubr.bf16.gmra.mrb[0].mxu0 %v149
    %v345 = vpop.f32.mrb[0].mxu0
    %v346 = vadd.f32 %v128, %v345
    %v347 = vpop.f32.mrb[0].mxu0
    %v348 = vadd.f32 %v132, %v347
    %v349 = vpop.f32.mrb[0].mxu0
    %v350 = vadd.f32 %v128, %v349
    %v351 = vpop.f32.mrb[0].mxu0
    %v352 = vadd.f32 %v132, %v351
    %353 = vdwg.mxu0
    %354 = vmatprep.subr.bf16.mxu0 %v250
    %355 = vmatpush1.bf16.msra.mxu0 %v249
    %356 = vmatprep.subr.bf16.mxu0 %v254
    %357 = vmatpush1.bf16.msra.mxu0 %v253
    %358 = vmatprep.subr.bf16.mxu0 %v258
    %359 = vmatpush1.bf16.msra.mxu0 %v257
    %360 = vmatprep.subr.bf16.mxu0 %v262
    %361 = vmatpush1.bf16.msra.mxu0 %v261
    %362 = vmatprep.subr.bf16.mxu0 %v266
    %363 = vmatpush1.bf16.msra.mxu0 %v265
    %364 = vmatprep.subr.bf16.mxu0 %v270
    %365 = vmatpush1.bf16.msra.mxu0 %v269
    %366 = vmatprep.subr.bf16.mxu0 %v274
    %367 = vmatpush1.bf16.msra.mxu0 %v273
    %368 = vmatprep.subr.bf16.mxu0 %v278
    %369 = vmatpush1.bf16.msra.mxu0 %v277
    %370 = vmatprep.subr.bf16.mxu0 0
    %371 = vmatpush1.bf16.msra.mxu0 0
    %372 = vmatprep.subr.bf16.mxu0 0
    %373 = vmatpush1.bf16.msra.mxu0 0
    %374 = vmatprep.subr.bf16.mxu0 0
    %375 = vmatpush1.bf16.msra.mxu0 0
    %376 = vmatprep.subr.bf16.mxu0 0
    %377 = vmatpush1.bf16.msra.mxu0 0
    %378 = vmatprep.subr.bf16.mxu0 0
    %379 = vmatpush1.bf16.msra.mxu0 0
    %380 = vmatprep.subr.bf16.mxu0 0
    %381 = vmatpush1.bf16.msra.mxu0 0
    %382 = vmatprep.subr.bf16.mxu0 0
    %383 = vmatpush1.bf16.msra.mxu0 0
    %384 = vmatprep.subr.bf16.mxu0 0
    %385 = vmatpush1.bf16.msra.mxu0 0
    %386 = vmatprep.mubr.bf16.mxu0 0
    %387 = vmatmul.mubr.bf16.gmra.mrb[0].mxu0 %v149
    %v388 = vpop.f32.mrb[0].mxu0
    %v389 = vadd.f32 %v136, %v388
    %v390 = vpop.f32.mrb[0].mxu0
    %v391 = vadd.f32 %v140, %v390
    %v392 = vpop.f32.mrb[0].mxu0
    %v393 = vadd.f32 %v136, %v392
    %v394 = vpop.f32.mrb[0].mxu0
    %v395 = vadd.f32 %v140, %v394
    %396 = vdwg.mxu0
    %v397 = vld [vmem:[#allocation8] sm:$0xff]
    %v398 = vld [vmem:[#allocation8 + $0x8] sm:$0xff]
    %v399 = vld [vmem:[#allocation8 + $0x10] sm:$0xff]
    %v400 = vld [vmem:[#allocation8 + $0x18] sm:$0xff]
    %v401 = vld [vmem:[#allocation8 + $0x20] sm:$0xff]
    %v402 = vld [vmem:[#allocation8 + $0x28] sm:$0xff]
    %v403 = vld [vmem:[#allocation8 + $0x30] sm:$0xff]
    %v404 = vld [vmem:[#allocation8 + $0x38] sm:$0xff]
    %v405 = vld [vmem:[#allocation8 + $0x40] sm:$0xff]
    %v406 = vld [vmem:[#allocation8 + $0x48] sm:$0xff]
    %v407 = vld [vmem:[#allocation8 + $0x50] sm:$0xff]
    %v408 = vld [vmem:[#allocation8 + $0x58] sm:$0xff]
    %v409 = vld [vmem:[#allocation8 + $0x60] sm:$0xff]
    %v410 = vld [vmem:[#allocation8 + $0x68] sm:$0xff]
    %v411 = vld [vmem:[#allocation8 + $0x70] sm:$0xff]
    %v412 = vld [vmem:[#allocation8 + $0x78] sm:$0xff]
    %v413 = vld [vmem:[#allocation8 + $0x80] sm:$0xff]
    %v414 = vld [vmem:[#allocation8 + $0x88] sm:$0xff]
    %v415 = vld [vmem:[#allocation8 + $0x90] sm:$0xff]
    %v416 = vld [vmem:[#allocation8 + $0x98] sm:$0xff]
    %v417 = vld [vmem:[#allocation8 + $0xa0] sm:$0xff]
    %v418 = vld [vmem:[#allocation8 + $0xa8] sm:$0xff]
    %v419 = vld [vmem:[#allocation8 + $0xb0] sm:$0xff]
    %v420 = vld [vmem:[#allocation8 + $0xb8] sm:$0xff]
    %v421 = vld [vmem:[#allocation8 + $0xc0] sm:$0xff]
    %v422 = vld [vmem:[#allocation8 + $0xc8] sm:$0xff]
    %v423 = vld [vmem:[#allocation8 + $0xd0] sm:$0xff]
    %v424 = vld [vmem:[#allocation8 + $0xd8] sm:$0xff]
    %v425 = vld [vmem:[#allocation8 + $0xe0] sm:$0xff]
    %v426 = vld [vmem:[#allocation8 + $0xe8] sm:$0xff]
    %v427 = vld [vmem:[#allocation8 + $0xf0] sm:$0xff]
    %v428 = vld [vmem:[#allocation8 + $0xf8] sm:$0xff]
    %v429 = vld [vmem:[%s4] sm:$0xf]
    %v431 = vlaneseq
    %v432 = vshrl.u32 %v431, 7
    %v433 = vsub.s32 0, %v432
    %v434 = vrot.slane %v429, %v433
    %v435 = vlaneseq
    %v436 = vshrl.u32 %v435, 7
    %v437 = vsub.s32 1, %v436
    %v438 = vrot.slane %v429, %v437
    %v439 = vlaneseq
    %v440 = vshrl.u32 %v439, 7
    %v441 = vsub.s32 2, %v440
    %v442 = vrot.slane %v429, %v441
    %v443 = vlaneseq
    %v444 = vshrl.u32 %v443, 7
    %v445 = vsub.s32 3, %v444
    %v446 = vrot.slane %v429, %v445
    %v483 = vunpack.c.l.b16 %v397
    %v484 = vunpack.c.h.b16 %v397
    %v485 = vunpack.c.l.b16 %v398
    %v486 = vunpack.c.h.b16 %v398
    %v487 = vunpack.c.l.b16 %v399
    %v488 = vunpack.c.h.b16 %v399
    %v489 = vunpack.c.l.b16 %v400
    %v490 = vunpack.c.h.b16 %v400
    %v491 = vunpack.c.l.b16 %v401
    %v492 = vunpack.c.h.b16 %v401
    %v493 = vunpack.c.l.b16 %v402
    %v494 = vunpack.c.h.b16 %v402
    %v495 = vunpack.c.l.b16 %v403
    %v496 = vunpack.c.h.b16 %v403
    %v497 = vunpack.c.l.b16 %v404
    %v498 = vunpack.c.h.b16 %v404
    %v499 = vunpack.c.l.b16 %v405
    %v500 = vunpack.c.h.b16 %v405
    %v501 = vunpack.c.l.b16 %v406
    %v502 = vunpack.c.h.b16 %v406
    %v503 = vunpack.c.l.b16 %v407
    %v504 = vunpack.c.h.b16 %v407
    %v505 = vunpack.c.l.b16 %v408
    %v506 = vunpack.c.h.b16 %v408
    %v507 = vunpack.c.l.b16 %v409
    %v508 = vunpack.c.h.b16 %v409
    %v509 = vunpack.c.l.b16 %v410
    %v510 = vunpack.c.h.b16 %v410
    %v511 = vunpack.c.l.b16 %v411
    %v512 = vunpack.c.h.b16 %v411
    %v513 = vunpack.c.l.b16 %v412
    %v514 = vunpack.c.h.b16 %v412
    %v515 = vunpack.c.l.b16 %v413
    %v516 = vunpack.c.h.b16 %v413
    %v517 = vunpack.c.l.b16 %v414
    %v518 = vunpack.c.h.b16 %v414
    %v519 = vunpack.c.l.b16 %v415
    %v520 = vunpack.c.h.b16 %v415
    %v521 = vunpack.c.l.b16 %v416
    %v522 = vunpack.c.h.b16 %v416
    %v523 = vunpack.c.l.b16 %v417
    %v524 = vunpack.c.h.b16 %v417
    %v525 = vunpack.c.l.b16 %v418
    %v526 = vunpack.c.h.b16 %v418
    %v527 = vunpack.c.l.b16 %v419
    %v528 = vunpack.c.h.b16 %v419
    %v529 = vunpack.c.l.b16 %v420
    %v530 = vunpack.c.h.b16 %v420
    %v531 = vunpack.c.l.b16 %v421
    %v532 = vunpack.c.h.b16 %v421
    %v533 = vunpack.c.l.b16 %v422
    %v534 = vunpack.c.h.b16 %v422
    %v535 = vunpack.c.l.b16 %v423
    %v536 = vunpack.c.h.b16 %v423
    %v537 = vunpack.c.l.b16 %v424
    %v538 = vunpack.c.h.b16 %v424
    %v539 = vunpack.c.l.b16 %v425
    %v540 = vunpack.c.h.b16 %v425
    %v541 = vunpack.c.l.b16 %v426
    %v542 = vunpack.c.h.b16 %v426
    %v543 = vunpack.c.l.b16 %v427
    %v544 = vunpack.c.h.b16 %v427
    %v545 = vunpack.c.l.b16 %v428
    %v546 = vunpack.c.h.b16 %v428
    %v547 = vpack.c.b16 %v487, %v483
    %v548 = vpack.c.b16 %v488, %v484
    %v549 = vpack.c.b16 %v489, %v485
    %v550 = vpack.c.b16 %v490, %v486
    %v551 = vpack.c.b16 %v495, %v491
    %v552 = vpack.c.b16 %v496, %v492
    %v553 = vpack.c.b16 %v497, %v493
    %v554 = vpack.c.b16 %v498, %v494
    %v555 = vpack.c.b16 %v503, %v499
    %v556 = vpack.c.b16 %v504, %v500
    %v557 = vpack.c.b16 %v505, %v501
    %v558 = vpack.c.b16 %v506, %v502
    %v559 = vpack.c.b16 %v511, %v507
    %v560 = vpack.c.b16 %v512, %v508
    %v561 = vpack.c.b16 %v513, %v509
    %v562 = vpack.c.b16 %v514, %v510
    %v563 = vpack.c.b16 %v519, %v515
    %v564 = vpack.c.b16 %v520, %v516
    %v565 = vpack.c.b16 %v521, %v517
    %v566 = vpack.c.b16 %v522, %v518
    %v567 = vpack.c.b16 %v527, %v523
    %v568 = vpack.c.b16 %v528, %v524
    %v569 = vpack.c.b16 %v529, %v525
    %v570 = vpack.c.b16 %v530, %v526
    %v571 = vpack.c.b16 %v535, %v531
    %v572 = vpack.c.b16 %v536, %v532
    %v573 = vpack.c.b16 %v537, %v533
    %v574 = vpack.c.b16 %v538, %v534
    %v575 = vpack.c.b16 %v543, %v539
    %v576 = vpack.c.b16 %v544, %v540
    %v577 = vpack.c.b16 %v545, %v541
    %v578 = vpack.c.b16 %v546, %v542
    %611 = vmatprep.subr.bf16.mxu0 %v548
    %612 = vmatpush1.bf16.msra.mxu0 %v547
    %613 = vmatprep.subr.bf16.mxu0 %v552
    %614 = vmatpush1.bf16.msra.mxu0 %v551
    %615 = vmatprep.subr.bf16.mxu0 %v556
    %616 = vmatpush1.bf16.msra.mxu0 %v555
    %617 = vmatprep.subr.bf16.mxu0 %v560
    %618 = vmatpush1.bf16.msra.mxu0 %v559
    %619 = vmatprep.subr.bf16.mxu0 %v564
    %620 = vmatpush1.bf16.msra.mxu0 %v563
    %621 = vmatprep.subr.bf16.mxu0 %v568
    %622 = vmatpush1.bf16.msra.mxu0 %v567
    %623 = vmatprep.subr.bf16.mxu0 %v572
    %624 = vmatpush1.bf16.msra.mxu0 %v571
    %625 = vmatprep.subr.bf16.mxu0 %v576
    %626 = vmatpush1.bf16.msra.mxu0 %v575
    %627 = vmatprep.subr.bf16.mxu0 0
    %628 = vmatpush1.bf16.msra.mxu0 0
    %629 = vmatprep.subr.bf16.mxu0 0
    %630 = vmatpush1.bf16.msra.mxu0 0
    %631 = vmatprep.subr.bf16.mxu0 0
    %632 = vmatpush1.bf16.msra.mxu0 0
    %633 = vmatprep.subr.bf16.mxu0 0
    %634 = vmatpush1.bf16.msra.mxu0 0
    %635 = vmatprep.subr.bf16.mxu0 0
    %636 = vmatpush1.bf16.msra.mxu0 0
    %637 = vmatprep.subr.bf16.mxu0 0
    %638 = vmatpush1.bf16.msra.mxu0 0
    %639 = vmatprep.subr.bf16.mxu0 0
    %640 = vmatpush1.bf16.msra.mxu0 0
    %641 = vmatprep.subr.bf16.mxu0 0
    %642 = vmatpush1.bf16.msra.mxu0 0
    %643 = vmatprep.mubr.bf16.mxu0 0
    %644 = vmatmul.mubr.bf16.gmra.mrb[0].mxu0 %v149
    %v645 = vpop.f32.mrb[0].mxu0
    %v646 = vadd.f32 %v434, %v645
    %v647 = vpop.f32.mrb[0].mxu0
    %v648 = vadd.f32 %v438, %v647
    %v649 = vpop.f32.mrb[0].mxu0
    %v650 = vadd.f32 %v434, %v649
    %v651 = vpop.f32.mrb[0].mxu0
    %v652 = vadd.f32 %v438, %v651
    %653 = vdwg.mxu0
    %654 = vmatprep.subr.bf16.mxu0 %v550
    %655 = vmatpush1.bf16.msra.mxu0 %v549
    %656 = vmatprep.subr.bf16.mxu0 %v554
    %657 = vmatpush1.bf16.msra.mxu0 %v553
    %658 = vmatprep.subr.bf16.mxu0 %v558
    %659 = vmatpush1.bf16.msra.mxu0 %v557
    %660 = vmatprep.subr.bf16.mxu0 %v562
    %661 = vmatpush1.bf16.msra.mxu0 %v561
    %662 = vmatprep.subr.bf16.mxu0 %v566
    %663 = vmatpush1.bf16.msra.mxu0 %v565
    %664 = vmatprep.subr.bf16.mxu0 %v570
    %665 = vmatpush1.bf16.msra.mxu0 %v569
    %666 = vmatprep.subr.bf16.mxu0 %v574
    %667 = vmatpush1.bf16.msra.mxu0 %v573
    %668 = vmatprep.subr.bf16.mxu0 %v578
    %669 = vmatpush1.bf16.msra.mxu0 %v577
    %670 = vmatprep.subr.bf16.mxu0 0
    %671 = vmatpush1.bf16.msra.mxu0 0
    %672 = vmatprep.subr.bf16.mxu0 0
    %673 = vmatpush1.bf16.msra.mxu0 0
    %674 = vmatprep.subr.bf16.mxu0 0
    %675 = vmatpush1.bf16.msra.mxu0 0
    %676 = vmatprep.subr.bf16.mxu0 0
    %677 = vmatpush1.bf16.msra.mxu0 0
    %678 = vmatprep.subr.bf16.mxu0 0
    %679 = vmatpush1.bf16.msra.mxu0 0
    %680 = vmatprep.subr.bf16.mxu0 0
    %681 = vmatpush1.bf16.msra.mxu0 0
    %682 = vmatprep.subr.bf16.mxu0 0
    %683 = vmatpush1.bf16.msra.mxu0 0
    %684 = vmatprep.subr.bf16.mxu0 0
    %685 = vmatpush1.bf16.msra.mxu0 0
    %686 = vmatprep.mubr.bf16.mxu0 0
    %687 = vmatmul.mubr.bf16.gmra.mrb[0].mxu0 %v149
    %v688 = vpop.f32.mrb[0].mxu0
    %v689 = vadd.f32 %v442, %v688
    %v690 = vpop.f32.mrb[0].mxu0
    %v691 = vadd.f32 %v446, %v690
    %v692 = vpop.f32.mrb[0].mxu0
    %v693 = vadd.f32 %v442, %v692
    %v694 = vpop.f32.mrb[0].mxu0
    %v695 = vadd.f32 %v446, %v694
    %696 = vdwg.mxu0
    %v697 = vxor.u32 %v346, 2147483648
    %v698 = vxor.u32 %v348, 2147483648
    %v699 = vxor.u32 %v389, 2147483648
    %v700 = vxor.u32 %v391, 2147483648
    %v701 = vxor.u32 %v350, 2147483648
    %v702 = vxor.u32 %v352, 2147483648
    %v703 = vxor.u32 %v393, 2147483648
    %v704 = vxor.u32 %v395, 2147483648
    %v705 = vmul.f32 %v697, 1.442695
    %v706 = vpow.pop %v705
    %v707 = vmul.f32 %v698, 1.442695
    %v708 = vpow.pop %v707
    %v709 = vmul.f32 %v699, 1.442695
    %v710 = vpow.pop %v709
    %v711 = vmul.f32 %v700, 1.442695
    %v712 = vpow.pop %v711
    %v713 = vmul.f32 %v701, 1.442695
    %v714 = vpow.pop %v713
    %v715 = vmul.f32 %v702, 1.442695
    %v716 = vpow.pop %v715
    %v717 = vmul.f32 %v703, 1.442695
    %v718 = vpow.pop %v717
    %v719 = vmul.f32 %v704, 1.442695
    %v720 = vpow.pop %v719
    %v721 = vadd.f32 %v706, 1.0
    %v722 = vadd.f32 %v708, 1.0
    %v723 = vadd.f32 %v710, 1.0
    %v724 = vadd.f32 %v712, 1.0
    %v725 = vadd.f32 %v714, 1.0
    %v726 = vadd.f32 %v716, 1.0
    %v727 = vadd.f32 %v718, 1.0
    %v728 = vadd.f32 %v720, 1.0
    %v729 = vrcp.pop %v721
    %v730 = vmul.f32 1.0, %v729
    %v731 = vrcp.pop %v722
    %v732 = vmul.f32 1.0, %v731
    %v733 = vrcp.pop %v723
    %v734 = vmul.f32 1.0, %v733
    %v735 = vrcp.pop %v724
    %v736 = vmul.f32 1.0, %v735
    %v737 = vrcp.pop %v725
    %v738 = vmul.f32 1.0, %v737
    %v739 = vrcp.pop %v726
    %v740 = vmul.f32 1.0, %v739
    %v741 = vrcp.pop %v727
    %v742 = vmul.f32 1.0, %v741
    %v743 = vrcp.pop %v728
    %v744 = vmul.f32 1.0, %v743
    %v745 = vmul.f32 %v346, %v730
    %v746 = vmul.f32 %v348, %v732
    %v747 = vmul.f32 %v389, %v734
    %v748 = vmul.f32 %v391, %v736
    %v749 = vmul.f32 %v350, %v738
    %v750 = vmul.f32 %v352, %v740
    %v751 = vmul.f32 %v393, %v742
    %v752 = vmul.f32 %v395, %v744
    %v753 = vmul.f32 %v745, %v646
    %v754 = vmul.f32 %v746, %v648
    %v755 = vmul.f32 %v747, %v689
    %v756 = vmul.f32 %v748, %v691
    %v757 = vmul.f32 %v749, %v650
    %v758 = vmul.f32 %v750, %v652
    %v759 = vmul.f32 %v751, %v693
    %v760 = vmul.f32 %v752, %v695
    %v761 = vpack.c.bf16 %v757, %v753
    %v762 = vpack.c.bf16 %v758, %v754
    %v763 = vpack.c.bf16 %v759, %v755
    %v764 = vpack.c.bf16 %v760, %v756
    %v765 = vld [vmem:[#allocation2] sm:$0xff]
    %v766 = vld [vmem:[#allocation2 + $0x8] sm:$0xff]
    %v767 = vld [vmem:[#allocation9] sm:$0xf]
    %v768 = vld [vmem:[#allocation9 + $0x4] sm:$0xf]
    %v769 = vld [vmem:[#allocation9 + $0x8] sm:$0xf]
    %v770 = vld [vmem:[#allocation9 + $0xc] sm:$0xf]
    %v771 = vld [vmem:[#allocation9 + $0x10] sm:$0xf]
    %v772 = vld [vmem:[#allocation9 + $0x14] sm:$0xf]
    %v773 = vld [vmem:[#allocation9 + $0x18] sm:$0xf]
    %v774 = vld [vmem:[#allocation9 + $0x1c] sm:$0xf]
    %v775 = vld [vmem:[#allocation9 + $0x20] sm:$0xf]
    %v776 = vld [vmem:[#allocation9 + $0x24] sm:$0xf]
    %v777 = vld [vmem:[#allocation9 + $0x28] sm:$0xf]
    %v778 = vld [vmem:[#allocation9 + $0x2c] sm:$0xf]
    %v779 = vld [vmem:[#allocation9 + $0x30] sm:$0xf]
    %v780 = vld [vmem:[#allocation9 + $0x34] sm:$0xf]
    %v781 = vld [vmem:[#allocation9 + $0x38] sm:$0xf]
    %v782 = vld [vmem:[#allocation9 + $0x3c] sm:$0xf]
    %v783 = vld [vmem:[#allocation9 + $0x40] sm:$0xf]
    %v784 = vld [vmem:[#allocation9 + $0x44] sm:$0xf]
    %v785 = vld [vmem:[#allocation9 + $0x48] sm:$0xf]
    %v786 = vld [vmem:[#allocation9 + $0x4c] sm:$0xf]
    %v787 = vld [vmem:[#allocation9 + $0x50] sm:$0xf]
    %v788 = vld [vmem:[#allocation9 + $0x54] sm:$0xf]
    %v789 = vld [vmem:[#allocation9 + $0x58] sm:$0xf]
    %v790 = vld [vmem:[#allocation9 + $0x5c] sm:$0xf]
    %v791 = vld [vmem:[#allocation9 + $0x60] sm:$0xf]
    %v792 = vld [vmem:[#allocation9 + $0x64] sm:$0xf]
    %v793 = vld [vmem:[#allocation9 + $0x68] sm:$0xf]
    %v794 = vld [vmem:[#allocation9 + $0x6c] sm:$0xf]
    %v795 = vld [vmem:[#allocation9 + $0x70] sm:$0xf]
    %v796 = vld [vmem:[#allocation9 + $0x74] sm:$0xf]
    %v797 = vld [vmem:[#allocation9 + $0x78] sm:$0xf]
    %v798 = vld [vmem:[#allocation9 + $0x7c] sm:$0xf]
    %v799 = vld [vmem:[#allocation9 + $0x80] sm:$0xf]
    %v800 = vld [vmem:[#allocation9 + $0x84] sm:$0xf]
    %v801 = vld [vmem:[#allocation9 + $0x88] sm:$0xf]
    %v802 = vld [vmem:[#allocation9 + $0x8c] sm:$0xf]
    %v803 = vld [vmem:[#allocation9 + $0x90] sm:$0xf]
    %v804 = vld [vmem:[#allocation9 + $0x94] sm:$0xf]
    %v805 = vld [vmem:[#allocation9 + $0x98] sm:$0xf]
    %v806 = vld [vmem:[#allocation9 + $0x9c] sm:$0xf]
    %v807 = vld [vmem:[#allocation9 + $0xa0] sm:$0xf]
    %v808 = vld [vmem:[#allocation9 + $0xa4] sm:$0xf]
    %v809 = vld [vmem:[#allocation9 + $0xa8] sm:$0xf]
    %v810 = vld [vmem:[#allocation9 + $0xac] sm:$0xf]
    %v811 = vld [vmem:[#allocation9 + $0xb0] sm:$0xf]
    %v812 = vld [vmem:[#allocation9 + $0xb4] sm:$0xf]
    %v813 = vld [vmem:[#allocation9 + $0xb8] sm:$0xf]
    %v814 = vld [vmem:[#allocation9 + $0xbc] sm:$0xf]
    %v815 = vld [vmem:[#allocation9 + $0xc0] sm:$0xf]
    %v816 = vld [vmem:[#allocation9 + $0xc4] sm:$0xf]
    %v817 = vld [vmem:[#allocation9 + $0xc8] sm:$0xf]
    %v818 = vld [vmem:[#allocation9 + $0xcc] sm:$0xf]
    %v819 = vld [vmem:[#allocation9 + $0xd0] sm:$0xf]
    %v820 = vld [vmem:[#allocation9 + $0xd4] sm:$0xf]
    %v821 = vld [vmem:[#allocation9 + $0xd8] sm:$0xf]
    %v822 = vld [vmem:[#allocation9 + $0xdc] sm:$0xf]
    %v823 = vld [vmem:[#allocation9 + $0xe0] sm:$0xf]
    %v824 = vld [vmem:[#allocation9 + $0xe4] sm:$0xf]
    %v825 = vld [vmem:[#allocation9 + $0xe8] sm:$0xf]
    %v826 = vld [vmem:[#allocation9 + $0xec] sm:$0xf]
    %v827 = vld [vmem:[#allocation9 + $0xf0] sm:$0xf]
    %v828 = vld [vmem:[#allocation9 + $0xf4] sm:$0xf]
    %v829 = vld [vmem:[#allocation9 + $0xf8] sm:$0xf]
    %v830 = vld [vmem:[#allocation9 + $0xfc] sm:$0xf]
    %v895 = vunpack.c.l.b16 %v767
    %v896 = vunpack.c.l.b16 %v768
    %v897 = vunpack.c.l.b16 %v769
    %v898 = vunpack.c.l.b16 %v770
    %v899 = vunpack.c.l.b16 %v771
    %v900 = vunpack.c.l.b16 %v772
    %v901 = vunpack.c.l.b16 %v773
    %v902 = vunpack.c.l.b16 %v774
    %v903 = vunpack.c.l.b16 %v775
    %v904 = vunpack.c.l.b16 %v776
    %v905 = vunpack.c.l.b16 %v777
    %v906 = vunpack.c.l.b16 %v778
    %v907 = vunpack.c.l.b16 %v779
    %v908 = vunpack.c.l.b16 %v780
    %v909 = vunpack.c.l.b16 %v781
    %v910 = vunpack.c.l.b16 %v782
    %v911 = vunpack.c.l.b16 %v783
    %v912 = vunpack.c.l.b16 %v784
    %v913 = vunpack.c.l.b16 %v785
    %v914 = vunpack.c.l.b16 %v786
    %v915 = vunpack.c.l.b16 %v787
    %v916 = vunpack.c.l.b16 %v788
    %v917 = vunpack.c.l.b16 %v789
    %v918 = vunpack.c.l.b16 %v790
    %v919 = vunpack.c.l.b16 %v791
    %v920 = vunpack.c.l.b16 %v792
    %v921 = vunpack.c.l.b16 %v793
    %v922 = vunpack.c.l.b16 %v794
    %v923 = vunpack.c.l.b16 %v795
    %v924 = vunpack.c.l.b16 %v796
    %v925 = vunpack.c.l.b16 %v797
    %v926 = vunpack.c.l.b16 %v798
    %v927 = vunpack.c.l.b16 %v799
    %v928 = vunpack.c.l.b16 %v800
    %v929 = vunpack.c.l.b16 %v801
    %v930 = vunpack.c.l.b16 %v802
    %v931 = vunpack.c.l.b16 %v803
    %v932 = vunpack.c.l.b16 %v804
    %v933 = vunpack.c.l.b16 %v805
    %v934 = vunpack.c.l.b16 %v806
    %v935 = vunpack.c.l.b16 %v807
    %v936 = vunpack.c.l.b16 %v808
    %v937 = vunpack.c.l.b16 %v809
    %v938 = vunpack.c.l.b16 %v810
    %v939 = vunpack.c.l.b16 %v811
    %v940 = vunpack.c.l.b16 %v812
    %v941 = vunpack.c.l.b16 %v813
    %v942 = vunpack.c.l.b16 %v814
    %v943 = vunpack.c.l.b16 %v815
    %v944 = vunpack.c.l.b16 %v816
    %v945 = vunpack.c.l.b16 %v817
    %v946 = vunpack.c.l.b16 %v818
    %v947 = vunpack.c.l.b16 %v819
    %v948 = vunpack.c.l.b16 %v820
    %v949 = vunpack.c.l.b16 %v821
    %v950 = vunpack.c.l.b16 %v822
    %v951 = vunpack.c.l.b16 %v823
    %v952 = vunpack.c.l.b16 %v824
    %v953 = vunpack.c.l.b16 %v825
    %v954 = vunpack.c.l.b16 %v826
    %v955 = vunpack.c.l.b16 %v827
    %v956 = vunpack.c.l.b16 %v828
    %v957 = vunpack.c.l.b16 %v829
    %v958 = vunpack.c.l.b16 %v830
    %v959 = vpack.c.b16 %v896, %v895
    %v960 = vpack.c.b16 %v898, %v897
    %v961 = vpack.c.b16 %v900, %v899
    %v962 = vpack.c.b16 %v902, %v901
    %v963 = vpack.c.b16 %v904, %v903
    %v964 = vpack.c.b16 %v906, %v905
    %v965 = vpack.c.b16 %v908, %v907
    %v966 = vpack.c.b16 %v910, %v909
    %v967 = vpack.c.b16 %v912, %v911
    %v968 = vpack.c.b16 %v914, %v913
    %v969 = vpack.c.b16 %v916, %v915
    %v970 = vpack.c.b16 %v918, %v917
    %v971 = vpack.c.b16 %v920, %v919
    %v972 = vpack.c.b16 %v922, %v921
    %v973 = vpack.c.b16 %v924, %v923
    %v974 = vpack.c.b16 %v926, %v925
    %v975 = vpack.c.b16 %v928, %v927
    %v976 = vpack.c.b16 %v930, %v929
    %v977 = vpack.c.b16 %v932, %v931
    %v978 = vpack.c.b16 %v934, %v933
    %v979 = vpack.c.b16 %v936, %v935
    %v980 = vpack.c.b16 %v938, %v937
    %v981 = vpack.c.b16 %v940, %v939
    %v982 = vpack.c.b16 %v942, %v941
    %v983 = vpack.c.b16 %v944, %v943
    %v984 = vpack.c.b16 %v946, %v945
    %v985 = vpack.c.b16 %v948, %v947
    %v986 = vpack.c.b16 %v950, %v949
    %v987 = vpack.c.b16 %v952, %v951
    %v988 = vpack.c.b16 %v954, %v953
    %v989 = vpack.c.b16 %v956, %v955
    %v990 = vpack.c.b16 %v958, %v957
    %1023 = vmatprep.subr.bf16.mxu0 0
    %1024 = vmatpush1.bf16.msra.mxu0 %v959
    %1025 = vmatprep.subr.bf16.mxu0 0
    %1026 = vmatpush1.bf16.msra.mxu0 %v960
    %1027 = vmatprep.subr.bf16.mxu0 0
    %1028 = vmatpush1.bf16.msra.mxu0 %v961
    %1029 = vmatprep.subr.bf16.mxu0 0
    %1030 = vmatpush1.bf16.msra.mxu0 %v962
    %1031 = vmatprep.subr.bf16.mxu0 0
    %1032 = vmatpush1.bf16.msra.mxu0 %v963
    %1033 = vmatprep.subr.bf16.mxu0 0
    %1034 = vmatpush1.bf16.msra.mxu0 %v964
    %1035 = vmatprep.subr.bf16.mxu0 0
    %1036 = vmatpush1.bf16.msra.mxu0 %v965
    %1037 = vmatprep.subr.bf16.mxu0 0
    %1038 = vmatpush1.bf16.msra.mxu0 %v966
    %1039 = vmatprep.subr.bf16.mxu0 0
    %1040 = vmatpush1.bf16.msra.mxu0 %v967
    %1041 = vmatprep.subr.bf16.mxu0 0
    %1042 = vmatpush1.bf16.msra.mxu0 %v968
    %1043 = vmatprep.subr.bf16.mxu0 0
    %1044 = vmatpush1.bf16.msra.mxu0 %v969
    %1045 = vmatprep.subr.bf16.mxu0 0
    %1046 = vmatpush1.bf16.msra.mxu0 %v970
    %1047 = vmatprep.subr.bf16.mxu0 0
    %1048 = vmatpush1.bf16.msra.mxu0 %v971
    %1049 = vmatprep.subr.bf16.mxu0 0
    %1050 = vmatpush1.bf16.msra.mxu0 %v972
    %1051 = vmatprep.subr.bf16.mxu0 0
    %1052 = vmatpush1.bf16.msra.mxu0 %v973
    %1053 = vmatprep.subr.bf16.mxu0 0
    %1054 = vmatpush1.bf16.msra.mxu0 %v974
    %1055 = vmatprep.mubr.bf16.mxu0 %v762
    %1056 = vmatmul.mubr.bf16.gmra.mrb[0].mxu0 %v761
    %v1057 = vpop.f32.mrb[0].mxu0
    %v1058 = vadd.f32 0.0, %v1057
    %v1059 = vpop.f32.mrb[0].mxu0
    %v1060 = vpop.f32.mrb[0].mxu0
    %v1061 = vadd.f32 0.0, %v1060
    %v1062 = vpop.f32.mrb[0].mxu0
    %1063 = vdwg.mxu0
    %1064 = vmatprep.subr.bf16.mxu0 0
    %1065 = vmatpush1.bf16.msra.mxu0 %v975
    %1066 = vmatprep.subr.bf16.mxu0 0
    %1067 = vmatpush1.bf16.msra.mxu0 %v976
    %1068 = vmatprep.subr.bf16.mxu0 0
    %1069 = vmatpush1.bf16.msra.mxu0 %v977
    %1070 = vmatprep.subr.bf16.mxu0 0
    %1071 = vmatpush1.bf16.msra.mxu0 %v978
    %1072 = vmatprep.subr.bf16.mxu0 0
    %1073 = vmatpush1.bf16.msra.mxu0 %v979
    %1074 = vmatprep.subr.bf16.mxu0 0
    %1075 = vmatpush1.bf16.msra.mxu0 %v980
    %1076 = vmatprep.subr.bf16.mxu0 0
    %1077 = vmatpush1.bf16.msra.mxu0 %v981
    %1078 = vmatprep.subr.bf16.mxu0 0
    %1079 = vmatpush1.bf16.msra.mxu0 %v982
    %1080 = vmatprep.subr.bf16.mxu0 0
    %1081 = vmatpush1.bf16.msra.mxu0 %v983
    %1082 = vmatprep.subr.bf16.mxu0 0
    %1083 = vmatpush1.bf16.msra.mxu0 %v984
    %1084 = vmatprep.subr.bf16.mxu0 0
    %1085 = vmatpush1.bf16.msra.mxu0 %v985
    %1086 = vmatprep.subr.bf16.mxu0 0
    %1087 = vmatpush1.bf16.msra.mxu0 %v986
    %1088 = vmatprep.subr.bf16.mxu0 0
    %1089 = vmatpush1.bf16.msra.mxu0 %v987
    %1090 = vmatprep.subr.bf16.mxu0 0
    %1091 = vmatpush1.bf16.msra.mxu0 %v988
    %1092 = vmatprep.subr.bf16.mxu0 0
    %1093 = vmatpush1.bf16.msra.mxu0 %v989
    %1094 = vmatprep.subr.bf16.mxu0 0
    %1095 = vmatpush1.bf16.msra.mxu0 %v990
    %1096 = vmatprep.mubr.bf16.mxu0 %v764
    %1097 = vmatmul.mubr.bf16.gmra.mrb[0].mxu0 %v763
    %v1098 = vpop.f32.mrb[0].mxu0
    %v1099 = vadd.f32 %v1058, %v1098
    %v1100 = vpop.f32.mrb[0].mxu0
    %v1101 = vpop.f32.mrb[0].mxu0
    %v1102 = vadd.f32 %v1061, %v1101
    %v1103 = vpop.f32.mrb[0].mxu0
    %1104 = vdwg.mxu0
    %v1105 = vadd.f32 %v765, %v1099
    %v1106 = vadd.f32 %v766, %v1102
    %1107 = vst [vmem:[#allocation2] sm:$0xff] %v1105
    %1108 = vst [vmem:[#allocation2 + $0x8] sm:$0xff] %v1106
    // Predicated region
    $region50: #{tpu_custom_call.1} parent=1 // pred_check
      %p1109 = pneg %p83
    $region51: #{tpu_custom_call.1} parent=1 // pred_check_branch
      %1111 = sbr.rel (%p1109) target = $region53
    $region52: #{tpu_custom_call.1} parent=1 // pred_region
      %v1112 = vld [vmem:[#allocation2] sm:$0xff]
      %v1113 = vld [vmem:[#allocation2 + $0x8] sm:$0xff]
      %v1114 = vld [vmem:[%s6] sm:$0x1]
      %v1116 = vlaneseq
      %v1117 = vshrl.u32 %v1116, 7
      %v1118 = vsub.s32 0, %v1117
      %v1119 = vrot.slane %v1114, %v1118
      %v1121 = vadd.f32 %v1112, %v1119
      %v1122 = vadd.f32 %v1113, %v1119
      %v1123 = vpack.c.bf16 %v1122, %v1121
      %v1125 = vunpack.c.l.b16 %v1123
      %v1126 = vunpack.c.h.b16 %v1123
      %v1127 = vpack.c.b16 %v1125, %v1125
      %v1128 = vpack.c.b16 %v1126, %v1126
      %1131 = vst [vmem:[#allocation11] sm:$0xf] %v1127
      %1132 = vst [vmem:[#allocation11 + $0x4] sm:$0xf] %v1128
    $region53: #{tpu_custom_call.1} parent=1 // pred_fallthru
      _
    // Predicated region
    $region54: #{tpu_custom_call.1} parent=1 // pred_check
      _
    $region55: #{tpu_custom_call.1} parent=1 // pred_check_branch
      %1134 = sbr.rel (0) target = $region57
    $region56: #{tpu_custom_call.1} parent=1 // pred_region
      %s1136 = ssub.s32 128, 128
      %1137 = vsyncadd [#allocation5], %s1136
      %s1138 = sshll.u32 [#allocation11], 4
      %s1139 = int_to_ptr.vmem [resolvable:$true] %s1138
      %1144 = dma.vmem_to_hbm [thread:$0]  %s1139, 128, %s7, [#allocation5], 64, 64, 4
    $region57: #{tpu_custom_call.1} parent=1 // pred_fallthru
      _
    // Predicated region
    $region58: #{tpu_custom_call.1} parent=1 // pred_check
      _
    $region59: #{tpu_custom_call.1} parent=1 // pred_check_branch
      %1146 = sbr.rel (0) target = $region61
    $region60: #{tpu_custom_call.1} parent=1 // pred_region
      %1147 = dma.done [#allocation5], 128
    $region61: #{tpu_custom_call.1} parent=1 // pred_fallthru
      _
    %1148 = vsyncpa [#allocation4], 1
    %1149 = vsyncpa [#allocation7], 1
    %1150 = vsyncpa [#allocation10], 1
    %1151 = vsyncpa [#allocation5], 1

</llo_original>
